<compile_context>
chip_gen: v7x
topology: tpu7x:2x2x1
jax: 0.10.0
libtpu: 0.0.40
codegen_flags: <defaults>
</compile_context>

<pallas_src>
import jax
import jax.numpy as jnp
from jax.experimental import pallas as pl
from jax.experimental.pallas import tpu as pltpu

LANE = 128
SUBLANE = 8  # f32 sublane granularity for the batch-tiled dim


def _round_up(x, m):
    return (x + m - 1) // m * m


def _detect_single_buffer_kwargs():
    """Feature-detect BlockSpec(pipeline_mode=pl.Buffered(1)) once, constructor-only."""
    if not hasattr(pl, "Buffered"):
        return {}
    try:
        pl.BlockSpec((8, 128), lambda i: (0, 0), pipeline_mode=pl.Buffered(1))
    except (TypeError, ValueError):
        return {}
    return {"pipeline_mode": pl.Buffered(1)}


_WEIGHT_SPEC_KWARGS = _detect_single_buffer_kwargs()


def _make_mlp_kernel(num_linear, compute_dtype):
    """Kernel closed over the static number of linear layers."""

    def kernel(*refs):
        x_ref = refs[0]
        o_ref = refs[-1]
        wb = refs[1:-1]                      # (w0, b0, w1, b1, ...)
        # x arrives as f32 straight from HBM; cast to the MXU dtype in VMEM.
        h = x_ref[...].astype(compute_dtype)
        for l in range(num_linear):
            w = wb[2 * l][...]               # (d_in_l, d_out_l) compute dtype (resident)
            b = wb[2 * l + 1][...]           # (1, d_out_l) f32 (resident)
            h = jnp.dot(h, w, preferred_element_type=jnp.float32) + b
            if l < num_linear - 1:
                h = jnp.maximum(h, 0.0)      # mid_activation = ReLU
                h = h.astype(compute_dtype)  # feed the next MXU push in bf16
        o_ref[...] = h.astype(o_ref.dtype)   # true-width store (clipped on ragged tile)

    return kernel


def prepare_mlp_params(params, compute_dtype=jnp.bfloat16):
    """One-time cast/reshape of weights (in,out) and biases for the kernel.

    Call this at init / cache it; do NOT redo it on every forward.
    """
    prepared = []
    for w, b in params:
        prepared.append((jnp.asarray(w, compute_dtype),
                         jnp.asarray(b, jnp.float32).reshape(1, -1)))
    return prepared


def mlp_forward(x, prepared_params, *, tile_m=2048, min_grid_steps=4,
                vmem_budget_bytes=40 * 1024 * 1024):
    """Fused MLP forward.

    x: (..., emb_dim) float (Linear acts on the last dim, as in PyTorch).
    prepared_params: output of prepare_mlp_params — list of (W, b) with W shaped
        (in, out) (transpose of torch.nn.Linear.weight) so the kernel computes
        x @ W + b.
    """
    orig_shape = x.shape
    d_in = orig_shape[-1]
    x2 = x.reshape(-1, d_in).astype(jnp.float32)
    n = x2.shape[0]

    num_linear = len(prepared_params)
    dims = [d_in] + [w.shape[1] for w, _ in prepared_params]
    d_out = dims[-1]
    assert prepared_params[0][0].shape[0] == d_in
    compute_dtype = prepared_params[0][0].dtype
    c_item = jnp.dtype(compute_dtype).itemsize

    # ---- VMEM footprint accounting (in-VMEM blocks are lane-padded to 128) ----
    dims_vmem = [_round_up(d, LANE) for d in dims]
    n_wbuf = 1 if _WEIGHT_SPEC_KWARGS else 2       # single- vs double-buffered weights
    static_bytes = sum(
        n_wbuf * (dims_vmem[l] * dims_vmem[l + 1] * c_item + dims_vmem[l + 1] * 4)
        for l in range(num_linear))
    if static_bytes > vmem_budget_bytes:
        # TODO(synk): tile the feature/K dims with an extra grid axis instead of
        # requiring all weights to be VMEM-resident (needed for huge hidden_dim,
        # especially on v7x's 64 MiB VMEM).
        raise NotImplementedError(
            f"resident weights need {static_bytes} B > {vmem_budget_bytes} B VMEM budget")

    def dyn_bytes(t):
        return (2 * t * dims_vmem[0] * 4            # x blocks (f32, double-buffered)
                + 2 * t * dims_vmem[-1] * 4         # out blocks (f32, double-buffered)
                + 2 * t * max(dims_vmem) * 4)       # live activations (f32 acc + bf16 copy)

    # ---- tile_m: as large as the VMEM budget allows, but keep the grid at least
    #      min_grid_steps long when n permits (megacore + pipeline overlap) -------
    tile_cap = max(SUBLANE, _round_up(int(tile_m), SUBLANE))
    tile_from_n = max(SUBLANE, _round_up(pl.cdiv(n, min_grid_steps), SUBLANE))
    tm = min(tile_cap, tile_from_n, _round_up(n, SUBLANE))
    while tm > SUBLANE and static_bytes + dyn_bytes(tm) > vmem_budget_bytes:
        tm = max(SUBLANE, _round_up(tm // 2, SUBLANE))
    grid = (pl.cdiv(n, tm),)    # ragged last block handled by Pallas (clipped store)

    # 48 MiB: safe under v7x's 64 MiB physical VMEM, ample headroom over the
    # 40 MiB tile budget; bigger MLPs on v5e/v6e (128 MiB physical) could raise it.
    vmem_limit = 48 * 1024 * 1024

    # ---- block specs: x/out batch-tiled, W/b grid-invariant (single-buffered) ---
    in_specs = [pl.BlockSpec((tm, d_in), lambda i: (i, 0))]
    flat_wb = []
    for l, (w, b) in enumerate(prepared_params):
        in_specs.append(pl.BlockSpec((dims[l], dims[l + 1]), lambda i: (0, 0),
                                     **_WEIGHT_SPEC_KWARGS))
        in_specs.append(pl.BlockSpec((1, dims[l + 1]), lambda i: (0, 0),
                                     **_WEIGHT_SPEC_KWARGS))
        flat_wb += [w, b]
    out_spec = pl.BlockSpec((tm, d_out), lambda i: (i, 0))

    # ---- advisory cost estimate for XLA scheduling around the custom call -------
    flops = 2 * n * sum(dims[l] * dims[l + 1] for l in range(num_linear))
    bytes_accessed = (n * d_in * 4
                      + sum(dims[l] * dims[l + 1] * c_item + dims[l + 1] * 4
                            for l in range(num_linear))
                      + n * d_out * 4)
    cost = pl.CostEstimate(flops=flops, transcendentals=0,
                           bytes_accessed=bytes_accessed)

    out = pl.pallas_call(
        _make_mlp_kernel(num_linear, compute_dtype),
        out_shape=jax.ShapeDtypeStruct((n, d_out), jnp.float32),
        grid_spec=pltpu.PrefetchScalarGridSpec(
            num_scalar_prefetch=0,
            grid=grid,
            in_specs=in_specs,
            out_specs=out_spec,
        ),
        compiler_params=pltpu.CompilerParams(
            dimension_semantics=("parallel",),
            vmem_limit_bytes=vmem_limit,
        ),
        cost_estimate=cost,
    )(x2, *flat_wb)

    return out.reshape(*orig_shape[:-1], d_out)


def init_mlp_params(key, emb_dim, hidden_dim, out_dim, layers,
                    dtype=jnp.float32):
    """Deterministic init mirroring the torch MLP's layer shapes.

    Weights are stored transposed (in, out) so the kernel computes x @ W.
    (The torch module xavier-inits weights with gain=1/in and zeros biases; init
    is not part of the forward semantics, so we use a 1/sqrt(fan_in) scale and
    small non-zero biases to make the correctness check meaningful.)
    """
    if layers <= 1:
        shapes = [(emb_dim, out_dim)]
    else:
        shapes = ([(emb_dim, hidden_dim)]
                  + [(hidden_dim, hidden_dim)] * (layers - 2)
                  + [(hidden_dim, out_dim)])
    params = []
    for fan_in, fan_out in shapes:
        key, kw, kb = jax.random.split(key, 3)
        bound = 1.0 / (fan_in ** 0.5)
        w_t = jax.random.uniform(kw, (fan_in, fan_out), dtype,
                                 minval=-bound, maxval=bound)
        b = 0.05 * jax.random.normal(kb, (fan_out,), dtype)
        params.append((w_t, b))
    return params


def mlp_ref(x, params, compute_dtype=jnp.bfloat16):
    """Pure-JAX reference mirroring the torch forward (and the kernel's dtype plan)."""
    h = x
    for l, (w_t, b) in enumerate(params):
        h = jnp.dot(h.astype(compute_dtype), w_t.astype(compute_dtype),
                    preferred_element_type=jnp.float32) + b.astype(jnp.float32)
        if l < len(params) - 1:
            h = jnp.maximum(h, 0.0)
    return h


if __name__ == "__main__":
    key = jax.random.PRNGKey(0)
    N, EMB_DIM, HIDDEN_DIM, OUT_DIM, LAYERS = 1024, 64, 32, 4, 3

    key, kx = jax.random.split(key)
    x = jax.random.normal(kx, (N, EMB_DIM), jnp.float32)
    params = init_mlp_params(key, EMB_DIM, HIDDEN_DIM, OUT_DIM, LAYERS)

    # One-time weight preparation (cast / reshape), kept out of the forward path.
    prepared = prepare_mlp_params(params, compute_dtype=jnp.bfloat16)

    out = mlp_forward(x, prepared, tile_m=2048)
    out = jax.block_until_ready(out)

    ref = mlp_ref(x, params, compute_dtype=jnp.bfloat16)
    assert out.shape == (N, OUT_DIM), out.shape
    max_err = float(jnp.max(jnp.abs(out - ref)))
    assert jnp.allclose(out, ref, atol=2e-3, rtol=2e-3), max_err

    print("KERNEL_OK")
</pallas_src>

<mosaic_0001>
module attributes {stable_mosaic.version = 11 : i64} {
  func.func @kernel(%arg0: i32, %arg1: memref<256x64xf32, #tpu.memory_space<vmem>>, %arg2: memref<64x32xbf16, #tpu.memory_space<vmem>>, %arg3: memref<1x32xf32, #tpu.memory_space<vmem>>, %arg4: memref<32x32xbf16, #tpu.memory_space<vmem>>, %arg5: memref<1x32xf32, #tpu.memory_space<vmem>>, %arg6: memref<32x4xbf16, #tpu.memory_space<vmem>>, %arg7: memref<1x4xf32, #tpu.memory_space<vmem>>, %arg8: memref<256x4xf32, #tpu.memory_space<vmem>>) attributes {dimension_semantics = [#tpu.dimension_semantics<parallel>], iteration_bounds = array<i64: 4>, scalar_prefetch = 0 : i64, scratch_operands = 0 : i64, tpu.core_type = #tpu.core_type<tc>, window_params = [{transform_indices = @transform_0, window_bounds = array<i64: 256, 64>}, {pipeline_mode = #tpu.pipeline_mode<synchronous>, transform_indices = @transform_1, window_bounds = array<i64: 64, 32>}, {pipeline_mode = #tpu.pipeline_mode<synchronous>, transform_indices = @transform_2, window_bounds = array<i64: 1, 32>}, {pipeline_mode = #tpu.pipeline_mode<synchronous>, transform_indices = @transform_3, window_bounds = array<i64: 32, 32>}, {pipeline_mode = #tpu.pipeline_mode<synchronous>, transform_indices = @transform_4, window_bounds = array<i64: 1, 32>}, {pipeline_mode = #tpu.pipeline_mode<synchronous>, transform_indices = @transform_5, window_bounds = array<i64: 32, 4>}, {pipeline_mode = #tpu.pipeline_mode<synchronous>, transform_indices = @transform_6, window_bounds = array<i64: 1, 4>}, {transform_indices = @transform_7, window_bounds = array<i64: 256, 4>}]} {
    %c0 = arith.constant 0 : index
    %c0_0 = arith.constant 0 : index
    %0 = vector.load %arg1[%c0, %c0_0] : memref<256x64xf32, #tpu.memory_space<vmem>>, vector<256x64xf32>
    %1 = arith.truncf %0 : vector<256x64xf32> to vector<256x64xbf16>
    %c0_1 = arith.constant 0 : index
    %c0_2 = arith.constant 0 : index
    %2 = vector.load %arg2[%c0_1, %c0_2] : memref<64x32xbf16, #tpu.memory_space<vmem>>, vector<64x32xbf16>
    %c0_3 = arith.constant 0 : index
    %c0_4 = arith.constant 0 : index
    %3 = vector.load %arg3[%c0_3, %c0_4] : memref<1x32xf32, #tpu.memory_space<vmem>>, vector<1x32xf32>
    %cst = arith.constant dense<0.000000e+00> : vector<256x32xf32>
    %4 = tpu.matmul %1, %2, %cst {dimension_numbers = #tpu.dot_dimension_numbers<[1], [0], [0], [1], [0, 0, 1, 1], [], []>} : vector<256x64xbf16>, vector<64x32xbf16>, vector<256x32xf32> -> vector<256x32xf32>
    %5 = vector.broadcast %3 : vector<1x32xf32> to vector<256x32xf32>
    %6 = arith.addf %4, %5 : vector<256x32xf32>
    %cst_5 = arith.constant 0.000000e+00 : f32
    %7 = vector.broadcast %cst_5 : f32 to vector<256x32xf32>
    %8 = arith.maximumf %6, %7 : vector<256x32xf32>
    %9 = arith.truncf %8 : vector<256x32xf32> to vector<256x32xbf16>
    %c0_6 = arith.constant 0 : index
    %c0_7 = arith.constant 0 : index
    %10 = vector.load %arg4[%c0_6, %c0_7] : memref<32x32xbf16, #tpu.memory_space<vmem>>, vector<32x32xbf16>
    %c0_8 = arith.constant 0 : index
    %c0_9 = arith.constant 0 : index
    %11 = vector.load %arg5[%c0_8, %c0_9] : memref<1x32xf32, #tpu.memory_space<vmem>>, vector<1x32xf32>
    %cst_10 = arith.constant dense<0.000000e+00> : vector<256x32xf32>
    %12 = tpu.matmul %9, %10, %cst_10 {dimension_numbers = #tpu.dot_dimension_numbers<[1], [0], [0], [1], [0, 0, 1, 1], [], []>} : vector<256x32xbf16>, vector<32x32xbf16>, vector<256x32xf32> -> vector<256x32xf32>
    %13 = vector.broadcast %11 : vector<1x32xf32> to vector<256x32xf32>
    %14 = arith.addf %12, %13 : vector<256x32xf32>
    %cst_11 = arith.constant 0.000000e+00 : f32
    %15 = vector.broadcast %cst_11 : f32 to vector<256x32xf32>
    %16 = arith.maximumf %14, %15 : vector<256x32xf32>
    %17 = arith.truncf %16 : vector<256x32xf32> to vector<256x32xbf16>
    %c0_12 = arith.constant 0 : index
    %c0_13 = arith.constant 0 : index
    %18 = vector.load %arg6[%c0_12, %c0_13] : memref<32x4xbf16, #tpu.memory_space<vmem>>, vector<32x4xbf16>
    %c0_14 = arith.constant 0 : index
    %c0_15 = arith.constant 0 : index
    %19 = vector.load %arg7[%c0_14, %c0_15] : memref<1x4xf32, #tpu.memory_space<vmem>>, vector<1x4xf32>
    %cst_16 = arith.constant dense<0.000000e+00> : vector<256x4xf32>
    %20 = tpu.matmul %17, %18, %cst_16 {dimension_numbers = #tpu.dot_dimension_numbers<[1], [0], [0], [1], [0, 0, 1, 1], [], []>} : vector<256x32xbf16>, vector<32x4xbf16>, vector<256x4xf32> -> vector<256x4xf32>
    %21 = vector.broadcast %19 : vector<1x4xf32> to vector<256x4xf32>
    %22 = arith.addf %20, %21 : vector<256x4xf32>
    %c0_17 = arith.constant 0 : index
    %c0_18 = arith.constant 0 : index
    %23 = vector.load %arg8[%c0_17, %c0_18] : memref<256x4xf32, #tpu.memory_space<vmem>>, vector<256x4xf32>
    tpu.vector_store %arg8[%c0_17, %c0_18], %22 {strides = array<i32>} : memref<256x4xf32, #tpu.memory_space<vmem>>, vector<256x4xf32>,
    return
  }
  func.func @transform_0(%arg0: i32) -> (i32, i32) {
    %c0_i32 = arith.constant 0 : i32
    %c0_i32_0 = arith.constant 0 : i32
    return %arg0, %c0_i32 : i32, i32
  }
  func.func @transform_1(%arg0: i32) -> (i32, i32) {
    %c0_i32 = arith.constant 0 : i32
    %c0_i32_0 = arith.constant 0 : i32
    %c0_i32_1 = arith.constant 0 : i32
    return %c0_i32, %c0_i32_0 : i32, i32
  }
  func.func @transform_2(%arg0: i32) -> (i32, i32) {
    %c0_i32 = arith.constant 0 : i32
    %c0_i32_0 = arith.constant 0 : i32
    %c0_i32_1 = arith.constant 0 : i32
    return %c0_i32, %c0_i32_0 : i32, i32
  }
  func.func @transform_3(%arg0: i32) -> (i32, i32) {
    %c0_i32 = arith.constant 0 : i32
    %c0_i32_0 = arith.constant 0 : i32
    %c0_i32_1 = arith.constant 0 : i32
    return %c0_i32, %c0_i32_0 : i32, i32
  }
  func.func @transform_4(%arg0: i32) -> (i32, i32) {
    %c0_i32 = arith.constant 0 : i32
    %c0_i32_0 = arith.constant 0 : i32
    %c0_i32_1 = arith.constant 0 : i32
    return %c0_i32, %c0_i32_0 : i32, i32
  }
  func.func @transform_5(%arg0: i32) -> (i32, i32) {
    %c0_i32 = arith.constant 0 : i32
    %c0_i32_0 = arith.constant 0 : i32
    %c0_i32_1 = arith.constant 0 : i32
    return %c0_i32, %c0_i32_0 : i32, i32
  }
  func.func @transform_6(%arg0: i32) -> (i32, i32) {
    %c0_i32 = arith.constant 0 : i32
    %c0_i32_0 = arith.constant 0 : i32
    %c0_i32_1 = arith.constant 0 : i32
    return %c0_i32, %c0_i32_0 : i32, i32
  }
  func.func @transform_7(%arg0: i32) -> (i32, i32) {
    %c0_i32 = arith.constant 0 : i32
    %c0_i32_0 = arith.constant 0 : i32
    return %arg0, %c0_i32 : i32, i32
  }
}

</mosaic_0001>

<llo_original>
// kernel: tpu_custom_call.1
$region0: #{tpu_custom_call.1}
  #allocation0 [shape = 'u32[]', space=smem, size = 0x4, offset = 0x4, fixed_abs, tag = 'smem constant byte address 0x4 - core index']
  #allocation1 [shape = 'u32[144,128]{1,0:T(1,128)}', space=vmem, size = 0x12000, scoped, tag = 'internal scratch']
  %s0 = inlined_call_operand.vmem [shape: f32[1024,64], index: 0, kind: input, shape index: {}]
  %s1 = inlined_call_operand.vmem [shape: bf16[64,32], index: 1, kind: input, shape index: {}]
  %s2 = inlined_call_operand.vmem [shape: f32[1,32], index: 2, kind: input, shape index: {}]
  %s3 = inlined_call_operand.vmem [shape: bf16[32,32], index: 3, kind: input, shape index: {}]
  %s4 = inlined_call_operand.vmem [shape: f32[1,32], index: 4, kind: input, shape index: {}]
  %s5 = inlined_call_operand.vmem [shape: bf16[32,4], index: 5, kind: input, shape index: {}]
  %s6 = inlined_call_operand.vmem [shape: f32[1,4], index: 6, kind: input, shape index: {}]
  %s7 = inlined_call_operand.vmem [shape: f32[1024,4], index: 7, kind: output, shape index: {}]
  %s8 = sld [smem:[#allocation0]]
  $region61: #{tpu_custom_call.1} parent=0
    _
  %s10 = ssub.s32 1, %s8
  %s11 = scalar_select 0, %s10, %s8
  loop: start=0, step=1, limit=6
  $region2: #{tpu_custom_call.1} parent=0 // loop_pre_header
    _
  $region3: #{tpu_custom_call.1} parent=0 // loop_header
    %s13 = sphi 0, %s17
    %p14 = scmp.ge.s32.totalorder %s13, 6
    %s23 = sphi 0, %s25
    %s26 = sphi 0, %s23
    %s27 = sphi 0, %s26
    %s43 = sphi 0, %s27
    %s47 = sphi 0, %s47
    %s49 = sphi 0, %s47
    %s50 = sphi 0, %s49
    %s64 = sphi 0, %s50
    %s68 = sphi 0, %s68
    %s70 = sphi 0, %s68
    %s71 = sphi 0, %s70
    %s85 = sphi 0, %s71
    %s89 = sphi 0, %s89
    %s91 = sphi 0, %s89
    %s92 = sphi 0, %s91
    %s106 = sphi 0, %s92
    %s110 = sphi 0, %s110
    %s112 = sphi 0, %s110
    %s113 = sphi 0, %s112
    %s127 = sphi 0, %s113
    %s131 = sphi 0, %s131
    %s133 = sphi 0, %s131
    %s134 = sphi 0, %s133
    %s148 = sphi 0, %s134
    %s152 = sphi 0, %s152
    %s154 = sphi 0, %s152
    %s155 = sphi 0, %s154
    %s169 = sphi 0, %s155
    %s175 = sphi 0, %s177
    %s178 = sphi 0, %s175
    %s179 = sphi 0, %s178
    %s195 = sphi 0, %s179
  $region4: #{tpu_custom_call.1} parent=0 // loop_header_branch
    %16 = sbr.rel (%p14) target = $region8
  $region5: #{tpu_custom_call.1} parent=0 // loop_body
    %s18 = ssub.s32 %s13, 1
    %s19 = ssub.s32 %s13, 2
    %s20 = sadd.s32 %s13, 1
    %s21 = ssub.s32 %s13, %s20
    %p22 = scmp.eq.s32.totalorder %s21, 0
    %s24 = sadd.s32 %s23, 1
    %s25 = scalar_select %p22, %s23, %s24
    %p28 = pneg %p22
    %p29 = scmp.eq.s32.totalorder %s13, 3
    %p30 = por %p28, %p29
    %p31 = scmp.ne.s32.totalorder %s23, %s26
    %p32 = scmp.eq.s32.totalorder %s13, 0
    %p33 = por %p31, %p32
    %p34 = scmp.ne.s32.totalorder %s23, %s26
    %p35 = scmp.eq.s32.totalorder %s18, 3
    %p36 = por %p34, %p35
    %p37 = scmp.ne.s32.totalorder %s26, %s27
    %p38 = scmp.eq.s32.totalorder %s18, 0
    %p39 = por %p37, %p38
    %p40 = scmp.ne.s32.totalorder %s26, %s27
    %p41 = scmp.eq.s32.totalorder %s19, 3
    %p42 = por %p40, %p41
    %p44 = scmp.ne.s32.totalorder %s27, %s43
    %p45 = scmp.eq.s32.totalorder %s19, 0
    %p46 = por %p44, %p45
    %s48 = sadd.s32 %s47, 1
    %p51 = scmp.eq.s32.totalorder %s13, 3
    %p52 = scmp.ne.s32.totalorder %s47, %s49
    %p53 = scmp.eq.s32.totalorder %s13, 0
    %p54 = por %p52, %p53
    %p55 = scmp.ne.s32.totalorder %s47, %s49
    %p56 = scmp.eq.s32.totalorder %s18, 3
    %p57 = por %p55, %p56
    %p58 = scmp.ne.s32.totalorder %s49, %s50
    %p59 = scmp.eq.s32.totalorder %s18, 0
    %p60 = por %p58, %p59
    %p61 = scmp.ne.s32.totalorder %s49, %s50
    %p62 = scmp.eq.s32.totalorder %s19, 3
    %p63 = por %p61, %p62
    %p65 = scmp.ne.s32.totalorder %s50, %s64
    %p66 = scmp.eq.s32.totalorder %s19, 0
    %p67 = por %p65, %p66
    %s69 = sadd.s32 %s68, 1
    %p72 = scmp.eq.s32.totalorder %s13, 3
    %p73 = scmp.ne.s32.totalorder %s68, %s70
    %p74 = scmp.eq.s32.totalorder %s13, 0
    %p75 = por %p73, %p74
    %p76 = scmp.ne.s32.totalorder %s68, %s70
    %p77 = scmp.eq.s32.totalorder %s18, 3
    %p78 = por %p76, %p77
    %p79 = scmp.ne.s32.totalorder %s70, %s71
    %p80 = scmp.eq.s32.totalorder %s18, 0
    %p81 = por %p79, %p80
    %p82 = scmp.ne.s32.totalorder %s70, %s71
    %p83 = scmp.eq.s32.totalorder %s19, 3
    %p84 = por %p82, %p83
    %p86 = scmp.ne.s32.totalorder %s71, %s85
    %p87 = scmp.eq.s32.totalorder %s19, 0
    %p88 = por %p86, %p87
    %s90 = sadd.s32 %s89, 1
    %p93 = scmp.eq.s32.totalorder %s13, 3
    %p94 = scmp.ne.s32.totalorder %s89, %s91
    %p95 = scmp.eq.s32.totalorder %s13, 0
    %p96 = por %p94, %p95
    %p97 = scmp.ne.s32.totalorder %s89, %s91
    %p98 = scmp.eq.s32.totalorder %s18, 3
    %p99 = por %p97, %p98
    %p100 = scmp.ne.s32.totalorder %s91, %s92
    %p101 = scmp.eq.s32.totalorder %s18, 0
    %p102 = por %p100, %p101
    %p103 = scmp.ne.s32.totalorder %s91, %s92
    %p104 = scmp.eq.s32.totalorder %s19, 3
    %p105 = por %p103, %p104
    %p107 = scmp.ne.s32.totalorder %s92, %s106
    %p108 = scmp.eq.s32.totalorder %s19, 0
    %p109 = por %p107, %p108
    %s111 = sadd.s32 %s110, 1
    %p114 = scmp.eq.s32.totalorder %s13, 3
    %p115 = scmp.ne.s32.totalorder %s110, %s112
    %p116 = scmp.eq.s32.totalorder %s13, 0
    %p117 = por %p115, %p116
    %p118 = scmp.ne.s32.totalorder %s110, %s112
    %p119 = scmp.eq.s32.totalorder %s18, 3
    %p120 = por %p118, %p119
    %p121 = scmp.ne.s32.totalorder %s112, %s113
    %p122 = scmp.eq.s32.totalorder %s18, 0
    %p123 = por %p121, %p122
    %p124 = scmp.ne.s32.totalorder %s112, %s113
    %p125 = scmp.eq.s32.totalorder %s19, 3
    %p126 = por %p124, %p125
    %p128 = scmp.ne.s32.totalorder %s113, %s127
    %p129 = scmp.eq.s32.totalorder %s19, 0
    %p130 = por %p128, %p129
    %s132 = sadd.s32 %s131, 1
    %p135 = scmp.eq.s32.totalorder %s13, 3
    %p136 = scmp.ne.s32.totalorder %s131, %s133
    %p137 = scmp.eq.s32.totalorder %s13, 0
    %p138 = por %p136, %p137
    %p139 = scmp.ne.s32.totalorder %s131, %s133
    %p140 = scmp.eq.s32.totalorder %s18, 3
    %p141 = por %p139, %p140
    %p142 = scmp.ne.s32.totalorder %s133, %s134
    %p143 = scmp.eq.s32.totalorder %s18, 0
    %p144 = por %p142, %p143
    %p145 = scmp.ne.s32.totalorder %s133, %s134
    %p146 = scmp.eq.s32.totalorder %s19, 3
    %p147 = por %p145, %p146
    %p149 = scmp.ne.s32.totalorder %s134, %s148
    %p150 = scmp.eq.s32.totalorder %s19, 0
    %p151 = por %p149, %p150
    %s153 = sadd.s32 %s152, 1
    %p156 = scmp.eq.s32.totalorder %s13, 3
    %p157 = scmp.ne.s32.totalorder %s152, %s154
    %p158 = scmp.eq.s32.totalorder %s13, 0
    %p159 = por %p157, %p158
    %p160 = scmp.ne.s32.totalorder %s152, %s154
    %p161 = scmp.eq.s32.totalorder %s18, 3
    %p162 = por %p160, %p161
    %p163 = scmp.ne.s32.totalorder %s154, %s155
    %p164 = scmp.eq.s32.totalorder %s18, 0
    %p165 = por %p163, %p164
    %p166 = scmp.ne.s32.totalorder %s154, %s155
    %p167 = scmp.eq.s32.totalorder %s19, 3
    %p168 = por %p166, %p167
    %p170 = scmp.ne.s32.totalorder %s155, %s169
    %p171 = scmp.eq.s32.totalorder %s19, 0
    %p172 = por %p170, %p171
    %s173 = ssub.s32 %s13, %s20
    %p174 = scmp.eq.s32.totalorder %s173, 0
    %s176 = sadd.s32 %s175, 1
    %s177 = scalar_select %p174, %s175, %s176
    %p180 = pneg %p174
    %p181 = scmp.eq.s32.totalorder %s13, 3
    %p182 = por %p180, %p181
    %p183 = scmp.ne.s32.totalorder %s175, %s178
    %p184 = scmp.eq.s32.totalorder %s13, 0
    %p185 = por %p183, %p184
    %p186 = scmp.ne.s32.totalorder %s175, %s178
    %p187 = scmp.eq.s32.totalorder %s18, 3
    %p188 = por %p186, %p187
    %p189 = scmp.ne.s32.totalorder %s178, %s179
    %p190 = scmp.eq.s32.totalorder %s18, 0
    %p191 = por %p189, %p190
    %p192 = scmp.ne.s32.totalorder %s178, %s179
    %p193 = scmp.eq.s32.totalorder %s19, 3
    %p194 = por %p192, %p193
    %p196 = scmp.ne.s32.totalorder %s179, %s195
    %p197 = scmp.eq.s32.totalorder %s19, 0
    %p198 = por %p196, %p197
    %p199 = scmp.le.s32.totalorder 1, %s13
    %p200 = scmp.lt.s32.totalorder %s13, 5
    %p201 = pnand %p199, %p200
    %p202 = pneg %p201
    // Predicated region
    $region9: #{tpu_custom_call.1} parent=5 // pred_check
      _
    $region10: #{tpu_custom_call.1} parent=5 // pred_check_branch
      %204 = sbr.rel (%p201) target = $region12
    $region11: #{tpu_custom_call.1} parent=5 // pred_region
      %s205 = ssub.s32 %s13, 1
      // Predicated region
      $region13: #{tpu_custom_call.1} parent=11 // pred_check
        %p206 = pneg %p60
      $region14: #{tpu_custom_call.1} parent=11 // pred_check_branch
        %208 = sbr.rel (%p206) target = $region16
      $region15: #{tpu_custom_call.1} parent=11 // pred_region
        _
      $region16: #{tpu_custom_call.1} parent=11 // pred_fallthru
        _
      // Predicated region
      $region17: #{tpu_custom_call.1} parent=11 // pred_check
        %p209 = pneg %p81
      $region18: #{tpu_custom_call.1} parent=11 // pred_check_branch
        %211 = sbr.rel (%p209) target = $region20
      $region19: #{tpu_custom_call.1} parent=11 // pred_region
        _
      $region20: #{tpu_custom_call.1} parent=11 // pred_fallthru
        _
      // Predicated region
      $region21: #{tpu_custom_call.1} parent=11 // pred_check
        %p212 = pneg %p102
      $region22: #{tpu_custom_call.1} parent=11 // pred_check_branch
        %214 = sbr.rel (%p212) target = $region24
      $region23: #{tpu_custom_call.1} parent=11 // pred_region
        _
      $region24: #{tpu_custom_call.1} parent=11 // pred_fallthru
        _
      // Predicated region
      $region25: #{tpu_custom_call.1} parent=11 // pred_check
        %p215 = pneg %p123
      $region26: #{tpu_custom_call.1} parent=11 // pred_check_branch
        %217 = sbr.rel (%p215) target = $region28
      $region27: #{tpu_custom_call.1} parent=11 // pred_region
        _
      $region28: #{tpu_custom_call.1} parent=11 // pred_fallthru
        _
      // Predicated region
      $region29: #{tpu_custom_call.1} parent=11 // pred_check
        %p218 = pneg %p144
      $region30: #{tpu_custom_call.1} parent=11 // pred_check_branch
        %220 = sbr.rel (%p218) target = $region32
      $region31: #{tpu_custom_call.1} parent=11 // pred_region
        _
      $region32: #{tpu_custom_call.1} parent=11 // pred_fallthru
        _
      // Predicated region
      $region33: #{tpu_custom_call.1} parent=11 // pred_check
        %p221 = pneg %p165
      $region34: #{tpu_custom_call.1} parent=11 // pred_check_branch
        %223 = sbr.rel (%p221) target = $region36
      $region35: #{tpu_custom_call.1} parent=11 // pred_region
        _
      $region36: #{tpu_custom_call.1} parent=11 // pred_fallthru
        _
    $region12: #{tpu_custom_call.1} parent=5 // pred_fallthru
      _
    %p224 = scmp.lt.s32.totalorder %s13, 4
    // Predicated region
    $region37: #{tpu_custom_call.1} parent=5 // pred_check
      %p225 = pneg %p224
    $region38: #{tpu_custom_call.1} parent=5 // pred_check_branch
      %227 = sbr.rel (%p225) target = $region40
    $region39: #{tpu_custom_call.1} parent=5 // pred_region
      // Predicated region
      $region41: #{tpu_custom_call.1} parent=39 // pred_check
        %p228 = pneg %p33
      $region42: #{tpu_custom_call.1} parent=39 // pred_check_branch
        %230 = sbr.rel (%p228) target = $region44
      $region43: #{tpu_custom_call.1} parent=39 // pred_region
        %s231 = smul.u32 32, %s13
        %p232 = scmp.lt.s32.totalorder %s231, 127
        %s233 = scalar_select %p232, %s231, 127
        %s234 = smul.addr %s233, 8
        %s235 = scalar_lea.vmem %s0, %s234
        %s236 = smul.u32 32, %s13
      $region44: #{tpu_custom_call.1} parent=39 // pred_fallthru
        _
    $region40: #{tpu_custom_call.1} parent=5 // pred_fallthru
      _
    %p237 = scmp.le.s32.totalorder 1, %s13
    %p238 = scmp.lt.s32.totalorder %s13, 5
    %p239 = pnand %p237, %p238
    %p240 = pneg %p239
    // Predicated region
    $region45: #{tpu_custom_call.1} parent=5 // pred_check
      _
    $region46: #{tpu_custom_call.1} parent=5 // pred_check_branch
      %242 = sbr.rel (%p239) target = $region48
    $region47: #{tpu_custom_call.1} parent=5 // pred_region
      %s243 = ssub.s32 %s13, 1
      %s244 = smul.u32 32, %s18
      %p245 = scmp.lt.s32.totalorder %s244, 127
      %s246 = scalar_select %p245, %s244, 127
      %s247 = smul.addr %s246, 8
      %s248 = scalar_lea.vmem %s0, %s247
      %p249 = pneg %p39
      %p250 = pneg %p36
      %p251 = pneg %p60
      %p252 = pneg %p57
      %p253 = pneg %p81
      %p254 = pneg %p78
      %p255 = pneg %p102
      %p256 = pneg %p99
      %p257 = pneg %p123
      %p258 = pneg %p120
      %p259 = pneg %p144
      %p260 = pneg %p141
      %p261 = pneg %p165
      %p262 = pneg %p162
      %p263 = pneg %p191
      %p264 = pneg %p188
      %s265 = smul.u32 32, %s18
      %p266 = scmp.lt.s32.totalorder %s265, 127
      %s267 = scalar_select %p266, %s265, 127
      %s268 = smul.addr %s267, 8
      %s269 = scalar_lea.vmem %s7, %s268
      %s270 = smul.u32 32, %s18
      %p271 = scmp.lt.s32.totalorder %s270, 127
      %s272 = scalar_select %p271, %s270, 127
      %s273 = smul.addr %s272, 8
      %s274 = scalar_lea.vmem %s0, %s273
      %s275 = smul.u32 32, %s18
      %s276 = smul.u32 32, %s18
      %p277 = scmp.lt.s32.totalorder %s276, 127
      %s278 = scalar_select %p277, %s276, 127
      %s279 = smul.addr %s278, 8
      %s280 = scalar_lea.vmem %s7, %s279
      %s281 = smul.u32 32, %s18
      %v283 = vld [vmem:[%s274] sm:$0xff]
      %v284 = vld [vmem:[%s274 + $0x8] sm:$0xff]
      %v285 = vld [vmem:[%s274 + $0x10] sm:$0xff]
      %v286 = vld [vmem:[%s274 + $0x18] sm:$0xff]
      %v287 = vld [vmem:[%s274 + $0x20] sm:$0xff]
      %v288 = vld [vmem:[%s274 + $0x28] sm:$0xff]
      %v289 = vld [vmem:[%s274 + $0x30] sm:$0xff]
      %v290 = vld [vmem:[%s274 + $0x38] sm:$0xff]
      %v291 = vld [vmem:[%s274 + $0x40] sm:$0xff]
      %v292 = vld [vmem:[%s274 + $0x48] sm:$0xff]
      %v293 = vld [vmem:[%s274 + $0x50] sm:$0xff]
      %v294 = vld [vmem:[%s274 + $0x58] sm:$0xff]
      %v295 = vld [vmem:[%s274 + $0x60] sm:$0xff]
      %v296 = vld [vmem:[%s274 + $0x68] sm:$0xff]
      %v297 = vld [vmem:[%s274 + $0x70] sm:$0xff]
      %v298 = vld [vmem:[%s274 + $0x78] sm:$0xff]
      %v299 = vld [vmem:[%s274 + $0x80] sm:$0xff]
      %v300 = vld [vmem:[%s274 + $0x88] sm:$0xff]
      %v301 = vld [vmem:[%s274 + $0x90] sm:$0xff]
      %v302 = vld [vmem:[%s274 + $0x98] sm:$0xff]
      %v303 = vld [vmem:[%s274 + $0xa0] sm:$0xff]
      %v304 = vld [vmem:[%s274 + $0xa8] sm:$0xff]
      %v305 = vld [vmem:[%s274 + $0xb0] sm:$0xff]
      %v306 = vld [vmem:[%s274 + $0xb8] sm:$0xff]
      %v307 = vld [vmem:[%s274 + $0xc0] sm:$0xff]
      %v308 = vld [vmem:[%s274 + $0xc8] sm:$0xff]
      %v309 = vld [vmem:[%s274 + $0xd0] sm:$0xff]
      %v310 = vld [vmem:[%s274 + $0xd8] sm:$0xff]
      %v311 = vld [vmem:[%s274 + $0xe0] sm:$0xff]
      %v312 = vld [vmem:[%s274 + $0xe8] sm:$0xff]
      %v313 = vld [vmem:[%s274 + $0xf0] sm:$0xff]
      %v314 = vld [vmem:[%s274 + $0xf8] sm:$0xff]
      %v315 = vpack.c.bf16 %v284, %v283
      %v316 = vpack.c.bf16 %v286, %v285
      %v317 = vpack.c.bf16 %v288, %v287
      %v318 = vpack.c.bf16 %v290, %v289
      %v319 = vpack.c.bf16 %v292, %v291
      %v320 = vpack.c.bf16 %v294, %v293
      %v321 = vpack.c.bf16 %v296, %v295
      %v322 = vpack.c.bf16 %v298, %v297
      %v323 = vpack.c.bf16 %v300, %v299
      %v324 = vpack.c.bf16 %v302, %v301
      %v325 = vpack.c.bf16 %v304, %v303
      %v326 = vpack.c.bf16 %v306, %v305
      %v327 = vpack.c.bf16 %v308, %v307
      %v328 = vpack.c.bf16 %v310, %v309
      %v329 = vpack.c.bf16 %v312, %v311
      %v330 = vpack.c.bf16 %v314, %v313
      %v331 = vld [vmem:[%s1] sm:$0xf]
      %v332 = vld [vmem:[%s1 + $0x4] sm:$0xf]
      %v333 = vld [vmem:[%s1 + $0x8] sm:$0xf]
      %v334 = vld [vmem:[%s1 + $0xc] sm:$0xf]
      %v335 = vld [vmem:[%s1 + $0x10] sm:$0xf]
      %v336 = vld [vmem:[%s1 + $0x14] sm:$0xf]
      %v337 = vld [vmem:[%s1 + $0x18] sm:$0xf]
      %v338 = vld [vmem:[%s1 + $0x1c] sm:$0xf]
      %v339 = vld [vmem:[%s2] sm:$0x1]
      %v341 = vlaneseq
      %v342 = vshrl.u32 %v341, 7
      %v343 = vsub.s32 0, %v342
      %v344 = vrot.slane %v339, %v343
      %v354 = vunpack.c.l.b16 %v331
      %v355 = vunpack.c.l.b16 %v332
      %v356 = vunpack.c.l.b16 %v333
      %v357 = vunpack.c.l.b16 %v334
      %v358 = vunpack.c.l.b16 %v335
      %v359 = vunpack.c.l.b16 %v336
      %v360 = vunpack.c.l.b16 %v337
      %v361 = vunpack.c.l.b16 %v338
      %v362 = vpack.c.b16 %v355, %v354
      %v363 = vpack.c.b16 %v357, %v356
      %v364 = vpack.c.b16 %v359, %v358
      %v365 = vpack.c.b16 %v361, %v360
      %vm370 = vcmask 523264
      %v372 = vsel %vm370, %v315, 0
      %v375 = vsel %vm370, %v316, 0
      %v378 = vsel %vm370, %v317, 0
      %v381 = vsel %vm370, %v318, 0
      %v384 = vsel %vm370, %v319, 0
      %v387 = vsel %vm370, %v320, 0
      %v390 = vsel %vm370, %v321, 0
      %v393 = vsel %vm370, %v322, 0
      %v396 = vsel %vm370, %v323, 0
      %v399 = vsel %vm370, %v324, 0
      %v402 = vsel %vm370, %v325, 0
      %v405 = vsel %vm370, %v326, 0
      %v408 = vsel %vm370, %v327, 0
      %v411 = vsel %vm370, %v328, 0
      %v414 = vsel %vm370, %v329, 0
      %v417 = vsel %vm370, %v330, 0
      %419 = vmatprep.subr.bf16.mxu0 0
      %420 = vmatpush1.bf16.msra.mxu0 %v362
      %421 = vmatprep.subr.bf16.mxu0 0
      %422 = vmatpush1.bf16.msra.mxu0 %v363
      %423 = vmatprep.subr.bf16.mxu0 0
      %424 = vmatpush1.bf16.msra.mxu0 %v364
      %425 = vmatprep.subr.bf16.mxu0 0
      %426 = vmatpush1.bf16.msra.mxu0 %v365
      %427 = vmatprep.subr.bf16.mxu0 0
      %428 = vmatpush1.bf16.msra.mxu0 0
      %429 = vmatprep.subr.bf16.mxu0 0
      %430 = vmatpush1.bf16.msra.mxu0 0
      %431 = vmatprep.subr.bf16.mxu0 0
      %432 = vmatpush1.bf16.msra.mxu0 0
      %433 = vmatprep.subr.bf16.mxu0 0
      %434 = vmatpush1.bf16.msra.mxu0 0
      %435 = vmatprep.subr.bf16.mxu0 0
      %436 = vmatpush1.bf16.msra.mxu0 0
      %437 = vmatprep.subr.bf16.mxu0 0
      %438 = vmatpush1.bf16.msra.mxu0 0
      %439 = vmatprep.subr.bf16.mxu0 0
      %440 = vmatpush1.bf16.msra.mxu0 0
      %441 = vmatprep.subr.bf16.mxu0 0
      %442 = vmatpush1.bf16.msra.mxu0 0
      %443 = vmatprep.subr.bf16.mxu0 0
      %444 = vmatpush1.bf16.msra.mxu0 0
      %445 = vmatprep.subr.bf16.mxu0 0
      %446 = vmatpush1.bf16.msra.mxu0 0
      %447 = vmatprep.subr.bf16.mxu0 0
      %448 = vmatpush1.bf16.msra.mxu0 0
      %449 = vmatprep.subr.bf16.mxu0 0
      %450 = vmatpush1.bf16.msra.mxu0 0
      %451 = vmatprep.mubr.bf16.mxu0 0
      %452 = vmatmul.mubr.bf16.gmra.mrb[0].mxu0 %v372
      %v453 = vpop.f32.mrb[0].mxu0
      %v454 = vadd.f32 %v344, %v453
      %v455 = vpop.f32.mrb[0].mxu0
      %v456 = vpop.f32.mrb[0].mxu0
      %v457 = vadd.f32 %v344, %v456
      %v458 = vpop.f32.mrb[0].mxu0
      %459 = vmatprep.mubr.bf16.mxu0 0
      %460 = vmatmul.mubr.bf16.gmra.mrb[0].mxu0 %v375
      %v461 = vpop.f32.mrb[0].mxu0
      %v462 = vadd.f32 %v344, %v461
      %v463 = vpop.f32.mrb[0].mxu0
      %v464 = vpop.f32.mrb[0].mxu0
      %v465 = vadd.f32 %v344, %v464
      %v466 = vpop.f32.mrb[0].mxu0
      %467 = vmatprep.mubr.bf16.mxu0 0
      %468 = vmatmul.mubr.bf16.gmra.mrb[0].mxu0 %v378
      %v469 = vpop.f32.mrb[0].mxu0
      %v470 = vadd.f32 %v344, %v469
      %v471 = vpop.f32.mrb[0].mxu0
      %v472 = vpop.f32.mrb[0].mxu0
      %v473 = vadd.f32 %v344, %v472
      %v474 = vpop.f32.mrb[0].mxu0
      %475 = vmatprep.mubr.bf16.mxu0 0
      %476 = vmatmul.mubr.bf16.gmra.mrb[0].mxu0 %v381
      %v477 = vpop.f32.mrb[0].mxu0
      %v478 = vadd.f32 %v344, %v477
      %v479 = vpop.f32.mrb[0].mxu0
      %v480 = vpop.f32.mrb[0].mxu0
      %v481 = vadd.f32 %v344, %v480
      %v482 = vpop.f32.mrb[0].mxu0
      %483 = vmatprep.mubr.bf16.mxu0 0
      %484 = vmatmul.mubr.bf16.gmra.mrb[0].mxu0 %v384
      %v485 = vpop.f32.mrb[0].mxu0
      %v486 = vadd.f32 %v344, %v485
      %v487 = vpop.f32.mrb[0].mxu0
      %v488 = vpop.f32.mrb[0].mxu0
      %v489 = vadd.f32 %v344, %v488
      %v490 = vpop.f32.mrb[0].mxu0
      %491 = vmatprep.mubr.bf16.mxu0 0
      %492 = vmatmul.mubr.bf16.gmra.mrb[0].mxu0 %v387
      %v493 = vpop.f32.mrb[0].mxu0
      %v494 = vadd.f32 %v344, %v493
      %v495 = vpop.f32.mrb[0].mxu0
      %v496 = vpop.f32.mrb[0].mxu0
      %v497 = vadd.f32 %v344, %v496
      %v498 = vpop.f32.mrb[0].mxu0
      %499 = vmatprep.mubr.bf16.mxu0 0
      %500 = vmatmul.mubr.bf16.gmra.mrb[0].mxu0 %v390
      %v501 = vpop.f32.mrb[0].mxu0
      %v502 = vadd.f32 %v344, %v501
      %v503 = vpop.f32.mrb[0].mxu0
      %v504 = vpop.f32.mrb[0].mxu0
      %v505 = vadd.f32 %v344, %v504
      %v506 = vpop.f32.mrb[0].mxu0
      %507 = vmatprep.mubr.bf16.mxu0 0
      %508 = vmatmul.mubr.bf16.gmra.mrb[0].mxu0 %v393
      %v509 = vpop.f32.mrb[0].mxu0
      %v510 = vadd.f32 %v344, %v509
      %v511 = vpop.f32.mrb[0].mxu0
      %v512 = vpop.f32.mrb[0].mxu0
      %v513 = vadd.f32 %v344, %v512
      %v514 = vpop.f32.mrb[0].mxu0
      %515 = vmatprep.mubr.bf16.mxu0 0
      %516 = vmatmul.mubr.bf16.gmra.mrb[0].mxu0 %v396
      %v517 = vpop.f32.mrb[0].mxu0
      %v518 = vadd.f32 %v344, %v517
      %v519 = vpop.f32.mrb[0].mxu0
      %v520 = vpop.f32.mrb[0].mxu0
      %v521 = vadd.f32 %v344, %v520
      %v522 = vpop.f32.mrb[0].mxu0
      %523 = vmatprep.mubr.bf16.mxu0 0
      %524 = vmatmul.mubr.bf16.gmra.mrb[0].mxu0 %v399
      %v525 = vpop.f32.mrb[0].mxu0
      %v526 = vadd.f32 %v344, %v525
      %v527 = vpop.f32.mrb[0].mxu0
      %v528 = vpop.f32.mrb[0].mxu0
      %v529 = vadd.f32 %v344, %v528
      %v530 = vpop.f32.mrb[0].mxu0
      %531 = vmatprep.mubr.bf16.mxu0 0
      %532 = vmatmul.mubr.bf16.gmra.mrb[0].mxu0 %v402
      %v533 = vpop.f32.mrb[0].mxu0
      %v534 = vadd.f32 %v344, %v533
      %v535 = vpop.f32.mrb[0].mxu0
      %v536 = vpop.f32.mrb[0].mxu0
      %v537 = vadd.f32 %v344, %v536
      %v538 = vpop.f32.mrb[0].mxu0
      %539 = vmatprep.mubr.bf16.mxu0 0
      %540 = vmatmul.mubr.bf16.gmra.mrb[0].mxu0 %v405
      %v541 = vpop.f32.mrb[0].mxu0
      %v542 = vadd.f32 %v344, %v541
      %v543 = vpop.f32.mrb[0].mxu0
      %v544 = vpop.f32.mrb[0].mxu0
      %v545 = vadd.f32 %v344, %v544
      %v546 = vpop.f32.mrb[0].mxu0
      %547 = vmatprep.mubr.bf16.mxu0 0
      %548 = vmatmul.mubr.bf16.gmra.mrb[0].mxu0 %v408
      %v549 = vpop.f32.mrb[0].mxu0
      %v550 = vadd.f32 %v344, %v549
      %v551 = vpop.f32.mrb[0].mxu0
      %v552 = vpop.f32.mrb[0].mxu0
      %v553 = vadd.f32 %v344, %v552
      %v554 = vpop.f32.mrb[0].mxu0
      %555 = vmatprep.mubr.bf16.mxu0 0
      %556 = vmatmul.mubr.bf16.gmra.mrb[0].mxu0 %v411
      %v557 = vpop.f32.mrb[0].mxu0
      %v558 = vadd.f32 %v344, %v557
      %v559 = vpop.f32.mrb[0].mxu0
      %v560 = vpop.f32.mrb[0].mxu0
      %v561 = vadd.f32 %v344, %v560
      %v562 = vpop.f32.mrb[0].mxu0
      %563 = vmatprep.mubr.bf16.mxu0 0
      %564 = vmatmul.mubr.bf16.gmra.mrb[0].mxu0 %v414
      %v565 = vpop.f32.mrb[0].mxu0
      %v566 = vadd.f32 %v344, %v565
      %v567 = vpop.f32.mrb[0].mxu0
      %v568 = vpop.f32.mrb[0].mxu0
      %v569 = vadd.f32 %v344, %v568
      %v570 = vpop.f32.mrb[0].mxu0
      %571 = vmatprep.mubr.bf16.mxu0 0
      %572 = vmatmul.mubr.bf16.gmra.mrb[0].mxu0 %v417
      %v573 = vpop.f32.mrb[0].mxu0
      %v574 = vadd.f32 %v344, %v573
      %v575 = vpop.f32.mrb[0].mxu0
      %v576 = vpop.f32.mrb[0].mxu0
      %v577 = vadd.f32 %v344, %v576
      %v578 = vpop.f32.mrb[0].mxu0
      %579 = vdwg.mxu0
      %v580 = vmax.f32 %v454, 0.0
      %v581 = vmax.f32 %v457, 0.0
      %v582 = vmax.f32 %v462, 0.0
      %v583 = vmax.f32 %v465, 0.0
      %v584 = vmax.f32 %v470, 0.0
      %v585 = vmax.f32 %v473, 0.0
      %v586 = vmax.f32 %v478, 0.0
      %v587 = vmax.f32 %v481, 0.0
      %v588 = vmax.f32 %v486, 0.0
      %v589 = vmax.f32 %v489, 0.0
      %v590 = vmax.f32 %v494, 0.0
      %v591 = vmax.f32 %v497, 0.0
      %v592 = vmax.f32 %v502, 0.0
      %v593 = vmax.f32 %v505, 0.0
      %v594 = vmax.f32 %v510, 0.0
      %v595 = vmax.f32 %v513, 0.0
      %v596 = vmax.f32 %v518, 0.0
      %v597 = vmax.f32 %v521, 0.0
      %v598 = vmax.f32 %v526, 0.0
      %v599 = vmax.f32 %v529, 0.0
      %v600 = vmax.f32 %v534, 0.0
      %v601 = vmax.f32 %v537, 0.0
      %v602 = vmax.f32 %v542, 0.0
      %v603 = vmax.f32 %v545, 0.0
      %v604 = vmax.f32 %v550, 0.0
      %v605 = vmax.f32 %v553, 0.0
      %v606 = vmax.f32 %v558, 0.0
      %v607 = vmax.f32 %v561, 0.0
      %v608 = vmax.f32 %v566, 0.0
      %v609 = vmax.f32 %v569, 0.0
      %v610 = vmax.f32 %v574, 0.0
      %v611 = vmax.f32 %v577, 0.0
      %v612 = vpack.c.bf16 %v581, %v580
      %v613 = vpack.c.bf16 %v583, %v582
      %v614 = vpack.c.bf16 %v585, %v584
      %v615 = vpack.c.bf16 %v587, %v586
      %v616 = vpack.c.bf16 %v589, %v588
      %v617 = vpack.c.bf16 %v591, %v590
      %v618 = vpack.c.bf16 %v593, %v592
      %v619 = vpack.c.bf16 %v595, %v594
      %v620 = vpack.c.bf16 %v597, %v596
      %v621 = vpack.c.bf16 %v599, %v598
      %v622 = vpack.c.bf16 %v601, %v600
      %v623 = vpack.c.bf16 %v603, %v602
      %v624 = vpack.c.bf16 %v605, %v604
      %v625 = vpack.c.bf16 %v607, %v606
      %v626 = vpack.c.bf16 %v609, %v608
      %v627 = vpack.c.bf16 %v611, %v610
      %v628 = vld [vmem:[%s3] sm:$0xf]
      %v629 = vld [vmem:[%s3 + $0x4] sm:$0xf]
      %v630 = vld [vmem:[%s3 + $0x8] sm:$0xf]
      %v631 = vld [vmem:[%s3 + $0xc] sm:$0xf]
      %v632 = vld [vmem:[%s4] sm:$0x1]
      %v634 = vlaneseq
      %v635 = vshrl.u32 %v634, 7
      %v636 = vsub.s32 0, %v635
      %v637 = vrot.slane %v632, %v636
      %v643 = vunpack.c.l.b16 %v628
      %v644 = vunpack.c.l.b16 %v629
      %v645 = vunpack.c.l.b16 %v630
      %v646 = vunpack.c.l.b16 %v631
      %v647 = vpack.c.b16 %v644, %v643
      %v648 = vpack.c.b16 %v646, %v645
      %vm651 = vcmask 261120
      %v653 = vsel %vm651, %v612, 0
      %v656 = vsel %vm651, %v613, 0
      %v659 = vsel %vm651, %v614, 0
      %v662 = vsel %vm651, %v615, 0
      %v665 = vsel %vm651, %v616, 0
      %v668 = vsel %vm651, %v617, 0
      %v671 = vsel %vm651, %v618, 0
      %v674 = vsel %vm651, %v619, 0
      %v677 = vsel %vm651, %v620, 0
      %v680 = vsel %vm651, %v621, 0
      %v683 = vsel %vm651, %v622, 0
      %v686 = vsel %vm651, %v623, 0
      %v689 = vsel %vm651, %v624, 0
      %v692 = vsel %vm651, %v625, 0
      %v695 = vsel %vm651, %v626, 0
      %v698 = vsel %vm651, %v627, 0
      %700 = vmatprep.subr.bf16.mxu0 0
      %701 = vmatpush1.bf16.msra.mxu0 %v647
      %702 = vmatprep.subr.bf16.mxu0 0
      %703 = vmatpush1.bf16.msra.mxu0 %v648
      %704 = vmatprep.subr.bf16.mxu0 0
      %705 = vmatpush1.bf16.msra.mxu0 0
      %706 = vmatprep.subr.bf16.mxu0 0
      %707 = vmatpush1.bf16.msra.mxu0 0
      %708 = vmatprep.subr.bf16.mxu0 0
      %709 = vmatpush1.bf16.msra.mxu0 0
      %710 = vmatprep.subr.bf16.mxu0 0
      %711 = vmatpush1.bf16.msra.mxu0 0
      %712 = vmatprep.subr.bf16.mxu0 0
      %713 = vmatpush1.bf16.msra.mxu0 0
      %714 = vmatprep.subr.bf16.mxu0 0
      %715 = vmatpush1.bf16.msra.mxu0 0
      %716 = vmatprep.subr.bf16.mxu0 0
      %717 = vmatpush1.bf16.msra.mxu0 0
      %718 = vmatprep.subr.bf16.mxu0 0
      %719 = vmatpush1.bf16.msra.mxu0 0
      %720 = vmatprep.subr.bf16.mxu0 0
      %721 = vmatpush1.bf16.msra.mxu0 0
      %722 = vmatprep.subr.bf16.mxu0 0
      %723 = vmatpush1.bf16.msra.mxu0 0
      %724 = vmatprep.subr.bf16.mxu0 0
      %725 = vmatpush1.bf16.msra.mxu0 0
      %726 = vmatprep.subr.bf16.mxu0 0
      %727 = vmatpush1.bf16.msra.mxu0 0
      %728 = vmatprep.subr.bf16.mxu0 0
      %729 = vmatpush1.bf16.msra.mxu0 0
      %730 = vmatprep.subr.bf16.mxu0 0
      %731 = vmatpush1.bf16.msra.mxu0 0
      %732 = vmatprep.mubr.bf16.mxu0 0
      %733 = vmatmul.mubr.bf16.gmra.mrb[0].mxu0 %v653
      %v734 = vpop.f32.mrb[0].mxu0
      %v735 = vadd.f32 %v637, %v734
      %v736 = vpop.f32.mrb[0].mxu0
      %v737 = vpop.f32.mrb[0].mxu0
      %v738 = vadd.f32 %v637, %v737
      %v739 = vpop.f32.mrb[0].mxu0
      %740 = vmatprep.mubr.bf16.mxu0 0
      %741 = vmatmul.mubr.bf16.gmra.mrb[0].mxu0 %v656
      %v742 = vpop.f32.mrb[0].mxu0
      %v743 = vadd.f32 %v637, %v742
      %v744 = vpop.f32.mrb[0].mxu0
      %v745 = vpop.f32.mrb[0].mxu0
      %v746 = vadd.f32 %v637, %v745
      %v747 = vpop.f32.mrb[0].mxu0
      %748 = vmatprep.mubr.bf16.mxu0 0
      %749 = vmatmul.mubr.bf16.gmra.mrb[0].mxu0 %v659
      %v750 = vpop.f32.mrb[0].mxu0
      %v751 = vadd.f32 %v637, %v750
      %v752 = vpop.f32.mrb[0].mxu0
      %v753 = vpop.f32.mrb[0].mxu0
      %v754 = vadd.f32 %v637, %v753
      %v755 = vpop.f32.mrb[0].mxu0
      %756 = vmatprep.mubr.bf16.mxu0 0
      %757 = vmatmul.mubr.bf16.gmra.mrb[0].mxu0 %v662
      %v758 = vpop.f32.mrb[0].mxu0
      %v759 = vadd.f32 %v637, %v758
      %v760 = vpop.f32.mrb[0].mxu0
      %v761 = vpop.f32.mrb[0].mxu0
      %v762 = vadd.f32 %v637, %v761
      %v763 = vpop.f32.mrb[0].mxu0
      %764 = vmatprep.mubr.bf16.mxu0 0
      %765 = vmatmul.mubr.bf16.gmra.mrb[0].mxu0 %v665
      %v766 = vpop.f32.mrb[0].mxu0
      %v767 = vadd.f32 %v637, %v766
      %v768 = vpop.f32.mrb[0].mxu0
      %v769 = vpop.f32.mrb[0].mxu0
      %v770 = vadd.f32 %v637, %v769
      %v771 = vpop.f32.mrb[0].mxu0
      %772 = vmatprep.mubr.bf16.mxu0 0
      %773 = vmatmul.mubr.bf16.gmra.mrb[0].mxu0 %v668
      %v774 = vpop.f32.mrb[0].mxu0
      %v775 = vadd.f32 %v637, %v774
      %v776 = vpop.f32.mrb[0].mxu0
      %v777 = vpop.f32.mrb[0].mxu0
      %v778 = vadd.f32 %v637, %v777
      %v779 = vpop.f32.mrb[0].mxu0
      %780 = vmatprep.mubr.bf16.mxu0 0
      %781 = vmatmul.mubr.bf16.gmra.mrb[0].mxu0 %v671
      %v782 = vpop.f32.mrb[0].mxu0
      %v783 = vadd.f32 %v637, %v782
      %v784 = vpop.f32.mrb[0].mxu0
      %v785 = vpop.f32.mrb[0].mxu0
      %v786 = vadd.f32 %v637, %v785
      %v787 = vpop.f32.mrb[0].mxu0
      %788 = vmatprep.mubr.bf16.mxu0 0
      %789 = vmatmul.mubr.bf16.gmra.mrb[0].mxu0 %v674
      %v790 = vpop.f32.mrb[0].mxu0
      %v791 = vadd.f32 %v637, %v790
      %v792 = vpop.f32.mrb[0].mxu0
      %v793 = vpop.f32.mrb[0].mxu0
      %v794 = vadd.f32 %v637, %v793
      %v795 = vpop.f32.mrb[0].mxu0
      %796 = vmatprep.mubr.bf16.mxu0 0
      %797 = vmatmul.mubr.bf16.gmra.mrb[0].mxu0 %v677
      %v798 = vpop.f32.mrb[0].mxu0
      %v799 = vadd.f32 %v637, %v798
      %v800 = vpop.f32.mrb[0].mxu0
      %v801 = vpop.f32.mrb[0].mxu0
      %v802 = vadd.f32 %v637, %v801
      %v803 = vpop.f32.mrb[0].mxu0
      %804 = vmatprep.mubr.bf16.mxu0 0
      %805 = vmatmul.mubr.bf16.gmra.mrb[0].mxu0 %v680
      %v806 = vpop.f32.mrb[0].mxu0
      %v807 = vadd.f32 %v637, %v806
      %v808 = vpop.f32.mrb[0].mxu0
      %v809 = vpop.f32.mrb[0].mxu0
      %v810 = vadd.f32 %v637, %v809
      %v811 = vpop.f32.mrb[0].mxu0
      %812 = vmatprep.mubr.bf16.mxu0 0
      %813 = vmatmul.mubr.bf16.gmra.mrb[0].mxu0 %v683
      %v814 = vpop.f32.mrb[0].mxu0
      %v815 = vadd.f32 %v637, %v814
      %v816 = vpop.f32.mrb[0].mxu0
      %v817 = vpop.f32.mrb[0].mxu0
      %v818 = vadd.f32 %v637, %v817
      %v819 = vpop.f32.mrb[0].mxu0
      %820 = vmatprep.mubr.bf16.mxu0 0
      %821 = vmatmul.mubr.bf16.gmra.mrb[0].mxu0 %v686
      %v822 = vpop.f32.mrb[0].mxu0
      %v823 = vadd.f32 %v637, %v822
      %v824 = vpop.f32.mrb[0].mxu0
      %v825 = vpop.f32.mrb[0].mxu0
      %v826 = vadd.f32 %v637, %v825
      %v827 = vpop.f32.mrb[0].mxu0
      %828 = vmatprep.mubr.bf16.mxu0 0
      %829 = vmatmul.mubr.bf16.gmra.mrb[0].mxu0 %v689
      %v830 = vpop.f32.mrb[0].mxu0
      %v831 = vadd.f32 %v637, %v830
      %v832 = vpop.f32.mrb[0].mxu0
      %v833 = vpop.f32.mrb[0].mxu0
      %v834 = vadd.f32 %v637, %v833
      %v835 = vpop.f32.mrb[0].mxu0
      %836 = vmatprep.mubr.bf16.mxu0 0
      %837 = vmatmul.mubr.bf16.gmra.mrb[0].mxu0 %v692
      %v838 = vpop.f32.mrb[0].mxu0
      %v839 = vadd.f32 %v637, %v838
      %v840 = vpop.f32.mrb[0].mxu0
      %v841 = vpop.f32.mrb[0].mxu0
      %v842 = vadd.f32 %v637, %v841
      %v843 = vpop.f32.mrb[0].mxu0
      %844 = vmatprep.mubr.bf16.mxu0 0
      %845 = vmatmul.mubr.bf16.gmra.mrb[0].mxu0 %v695
      %v846 = vpop.f32.mrb[0].mxu0
      %v847 = vadd.f32 %v637, %v846
      %v848 = vpop.f32.mrb[0].mxu0
      %v849 = vpop.f32.mrb[0].mxu0
      %v850 = vadd.f32 %v637, %v849
      %v851 = vpop.f32.mrb[0].mxu0
      %852 = vmatprep.mubr.bf16.mxu0 0
      %853 = vmatmul.mubr.bf16.gmra.mrb[0].mxu0 %v698
      %v854 = vpop.f32.mrb[0].mxu0
      %v855 = vadd.f32 %v637, %v854
      %v856 = vpop.f32.mrb[0].mxu0
      %v857 = vpop.f32.mrb[0].mxu0
      %v858 = vadd.f32 %v637, %v857
      %v859 = vpop.f32.mrb[0].mxu0
      %860 = vdwg.mxu0
      %v861 = vmax.f32 %v735, 0.0
      %v862 = vmax.f32 %v738, 0.0
      %v863 = vmax.f32 %v743, 0.0
      %v864 = vmax.f32 %v746, 0.0
      %v865 = vmax.f32 %v751, 0.0
      %v866 = vmax.f32 %v754, 0.0
      %v867 = vmax.f32 %v759, 0.0
      %v868 = vmax.f32 %v762, 0.0
      %v869 = vmax.f32 %v767, 0.0
      %v870 = vmax.f32 %v770, 0.0
      %v871 = vmax.f32 %v775, 0.0
      %v872 = vmax.f32 %v778, 0.0
      %v873 = vmax.f32 %v783, 0.0
      %v874 = vmax.f32 %v786, 0.0
      %v875 = vmax.f32 %v791, 0.0
      %v876 = vmax.f32 %v794, 0.0
      %v877 = vmax.f32 %v799, 0.0
      %v878 = vmax.f32 %v802, 0.0
      %v879 = vmax.f32 %v807, 0.0
      %v880 = vmax.f32 %v810, 0.0
      %v881 = vmax.f32 %v815, 0.0
      %v882 = vmax.f32 %v818, 0.0
      %v883 = vmax.f32 %v823, 0.0
      %v884 = vmax.f32 %v826, 0.0
      %v885 = vmax.f32 %v831, 0.0
      %v886 = vmax.f32 %v834, 0.0
      %v887 = vmax.f32 %v839, 0.0
      %v888 = vmax.f32 %v842, 0.0
      %v889 = vmax.f32 %v847, 0.0
      %v890 = vmax.f32 %v850, 0.0
      %v891 = vmax.f32 %v855, 0.0
      %v892 = vmax.f32 %v858, 0.0
      %v893 = vpack.c.bf16 %v862, %v861
      %v894 = vpack.c.bf16 %v864, %v863
      %v895 = vpack.c.bf16 %v866, %v865
      %v896 = vpack.c.bf16 %v868, %v867
      %v897 = vpack.c.bf16 %v870, %v869
      %v898 = vpack.c.bf16 %v872, %v871
      %v899 = vpack.c.bf16 %v874, %v873
      %v900 = vpack.c.bf16 %v876, %v875
      %v901 = vpack.c.bf16 %v878, %v877
      %v902 = vpack.c.bf16 %v880, %v879
      %v903 = vpack.c.bf16 %v882, %v881
      %v904 = vpack.c.bf16 %v884, %v883
      %v905 = vpack.c.bf16 %v886, %v885
      %v906 = vpack.c.bf16 %v888, %v887
      %v907 = vpack.c.bf16 %v890, %v889
      %v908 = vpack.c.bf16 %v892, %v891
      %v909 = vld [vmem:[%s5] sm:$0xf]
      %v910 = vld [vmem:[%s5 + $0x4] sm:$0xf]
      %v911 = vld [vmem:[%s5 + $0x8] sm:$0xf]
      %v912 = vld [vmem:[%s5 + $0xc] sm:$0xf]
      %v913 = vld [vmem:[%s6] sm:$0x1]
      %v915 = vlaneseq
      %v916 = vshrl.u32 %v915, 7
      %v917 = vsub.s32 0, %v916
      %v918 = vrot.slane %v913, %v917
      %v924 = vunpack.c.l.b16 %v909
      %v925 = vunpack.c.l.b16 %v910
      %v926 = vunpack.c.l.b16 %v911
      %v927 = vunpack.c.l.b16 %v912
      %v928 = vpack.c.b16 %v925, %v924
      %v929 = vpack.c.b16 %v927, %v926
      %v933 = vsel %vm651, %v893, 0
      %v936 = vsel %vm651, %v894, 0
      %v939 = vsel %vm651, %v895, 0
      %v942 = vsel %vm651, %v896, 0
      %v945 = vsel %vm651, %v897, 0
      %v948 = vsel %vm651, %v898, 0
      %v951 = vsel %vm651, %v899, 0
      %v954 = vsel %vm651, %v900, 0
      %v957 = vsel %vm651, %v901, 0
      %v960 = vsel %vm651, %v902, 0
      %v963 = vsel %vm651, %v903, 0
      %v966 = vsel %vm651, %v904, 0
      %v969 = vsel %vm651, %v905, 0
      %v972 = vsel %vm651, %v906, 0
      %v975 = vsel %vm651, %v907, 0
      %v978 = vsel %vm651, %v908, 0
      %980 = vmatprep.subr.bf16.mxu0 0
      %981 = vmatpush1.bf16.msra.mxu0 %v928
      %982 = vmatprep.subr.bf16.mxu0 0
      %983 = vmatpush1.bf16.msra.mxu0 %v929
      %984 = vmatprep.subr.bf16.mxu0 0
      %985 = vmatpush1.bf16.msra.mxu0 0
      %986 = vmatprep.subr.bf16.mxu0 0
      %987 = vmatpush1.bf16.msra.mxu0 0
      %988 = vmatprep.subr.bf16.mxu0 0
      %989 = vmatpush1.bf16.msra.mxu0 0
      %990 = vmatprep.subr.bf16.mxu0 0
      %991 = vmatpush1.bf16.msra.mxu0 0
      %992 = vmatprep.subr.bf16.mxu0 0
      %993 = vmatpush1.bf16.msra.mxu0 0
      %994 = vmatprep.subr.bf16.mxu0 0
      %995 = vmatpush1.bf16.msra.mxu0 0
      %996 = vmatprep.subr.bf16.mxu0 0
      %997 = vmatpush1.bf16.msra.mxu0 0
      %998 = vmatprep.subr.bf16.mxu0 0
      %999 = vmatpush1.bf16.msra.mxu0 0
      %1000 = vmatprep.subr.bf16.mxu0 0
      %1001 = vmatpush1.bf16.msra.mxu0 0
      %1002 = vmatprep.subr.bf16.mxu0 0
      %1003 = vmatpush1.bf16.msra.mxu0 0
      %1004 = vmatprep.subr.bf16.mxu0 0
      %1005 = vmatpush1.bf16.msra.mxu0 0
      %1006 = vmatprep.subr.bf16.mxu0 0
      %1007 = vmatpush1.bf16.msra.mxu0 0
      %1008 = vmatprep.subr.bf16.mxu0 0
      %1009 = vmatpush1.bf16.msra.mxu0 0
      %1010 = vmatprep.subr.bf16.mxu0 0
      %1011 = vmatpush1.bf16.msra.mxu0 0
      %1012 = vmatprep.mubr.bf16.mxu0 0
      %1013 = vmatmul.mubr.bf16.gmra.mrb[0].mxu0 %v933
      %v1014 = vpop.f32.mrb[0].mxu0
      %v1015 = vadd.f32 %v918, %v1014
      %v1016 = vpop.f32.mrb[0].mxu0
      %v1017 = vpop.f32.mrb[0].mxu0
      %v1018 = vadd.f32 %v918, %v1017
      %v1019 = vpop.f32.mrb[0].mxu0
      %1020 = vmatprep.mubr.bf16.mxu0 0
      %1021 = vmatmul.mubr.bf16.gmra.mrb[0].mxu0 %v936
      %v1022 = vpop.f32.mrb[0].mxu0
      %v1023 = vadd.f32 %v918, %v1022
      %v1024 = vpop.f32.mrb[0].mxu0
      %v1025 = vpop.f32.mrb[0].mxu0
      %v1026 = vadd.f32 %v918, %v1025
      %v1027 = vpop.f32.mrb[0].mxu0
      %1028 = vmatprep.mubr.bf16.mxu0 0
      %1029 = vmatmul.mubr.bf16.gmra.mrb[0].mxu0 %v939
      %v1030 = vpop.f32.mrb[0].mxu0
      %v1031 = vadd.f32 %v918, %v1030
      %v1032 = vpop.f32.mrb[0].mxu0
      %v1033 = vpop.f32.mrb[0].mxu0
      %v1034 = vadd.f32 %v918, %v1033
      %v1035 = vpop.f32.mrb[0].mxu0
      %1036 = vmatprep.mubr.bf16.mxu0 0
      %1037 = vmatmul.mubr.bf16.gmra.mrb[0].mxu0 %v942
      %v1038 = vpop.f32.mrb[0].mxu0
      %v1039 = vadd.f32 %v918, %v1038
      %v1040 = vpop.f32.mrb[0].mxu0
      %v1041 = vpop.f32.mrb[0].mxu0
      %v1042 = vadd.f32 %v918, %v1041
      %v1043 = vpop.f32.mrb[0].mxu0
      %1044 = vmatprep.mubr.bf16.mxu0 0
      %1045 = vmatmul.mubr.bf16.gmra.mrb[0].mxu0 %v945
      %v1046 = vpop.f32.mrb[0].mxu0
      %v1047 = vadd.f32 %v918, %v1046
      %v1048 = vpop.f32.mrb[0].mxu0
      %v1049 = vpop.f32.mrb[0].mxu0
      %v1050 = vadd.f32 %v918, %v1049
      %v1051 = vpop.f32.mrb[0].mxu0
      %1052 = vmatprep.mubr.bf16.mxu0 0
      %1053 = vmatmul.mubr.bf16.gmra.mrb[0].mxu0 %v948
      %v1054 = vpop.f32.mrb[0].mxu0
      %v1055 = vadd.f32 %v918, %v1054
      %v1056 = vpop.f32.mrb[0].mxu0
      %v1057 = vpop.f32.mrb[0].mxu0
      %v1058 = vadd.f32 %v918, %v1057
      %v1059 = vpop.f32.mrb[0].mxu0
      %1060 = vmatprep.mubr.bf16.mxu0 0
      %1061 = vmatmul.mubr.bf16.gmra.mrb[0].mxu0 %v951
      %v1062 = vpop.f32.mrb[0].mxu0
      %v1063 = vadd.f32 %v918, %v1062
      %v1064 = vpop.f32.mrb[0].mxu0
      %v1065 = vpop.f32.mrb[0].mxu0
      %v1066 = vadd.f32 %v918, %v1065
      %v1067 = vpop.f32.mrb[0].mxu0
      %1068 = vmatprep.mubr.bf16.mxu0 0
      %1069 = vmatmul.mubr.bf16.gmra.mrb[0].mxu0 %v954
      %v1070 = vpop.f32.mrb[0].mxu0
      %v1071 = vadd.f32 %v918, %v1070
      %v1072 = vpop.f32.mrb[0].mxu0
      %v1073 = vpop.f32.mrb[0].mxu0
      %v1074 = vadd.f32 %v918, %v1073
      %v1075 = vpop.f32.mrb[0].mxu0
      %1076 = vmatprep.mubr.bf16.mxu0 0
      %1077 = vmatmul.mubr.bf16.gmra.mrb[0].mxu0 %v957
      %v1078 = vpop.f32.mrb[0].mxu0
      %v1079 = vadd.f32 %v918, %v1078
      %v1080 = vpop.f32.mrb[0].mxu0
      %v1081 = vpop.f32.mrb[0].mxu0
      %v1082 = vadd.f32 %v918, %v1081
      %v1083 = vpop.f32.mrb[0].mxu0
      %1084 = vmatprep.mubr.bf16.mxu0 0
      %1085 = vmatmul.mubr.bf16.gmra.mrb[0].mxu0 %v960
      %v1086 = vpop.f32.mrb[0].mxu0
      %v1087 = vadd.f32 %v918, %v1086
      %v1088 = vpop.f32.mrb[0].mxu0
      %v1089 = vpop.f32.mrb[0].mxu0
      %v1090 = vadd.f32 %v918, %v1089
      %v1091 = vpop.f32.mrb[0].mxu0
      %1092 = vmatprep.mubr.bf16.mxu0 0
      %1093 = vmatmul.mubr.bf16.gmra.mrb[0].mxu0 %v963
      %v1094 = vpop.f32.mrb[0].mxu0
      %v1095 = vadd.f32 %v918, %v1094
      %v1096 = vpop.f32.mrb[0].mxu0
      %v1097 = vpop.f32.mrb[0].mxu0
      %v1098 = vadd.f32 %v918, %v1097
      %v1099 = vpop.f32.mrb[0].mxu0
      %1100 = vmatprep.mubr.bf16.mxu0 0
      %1101 = vmatmul.mubr.bf16.gmra.mrb[0].mxu0 %v966
      %v1102 = vpop.f32.mrb[0].mxu0
      %v1103 = vadd.f32 %v918, %v1102
      %v1104 = vpop.f32.mrb[0].mxu0
      %v1105 = vpop.f32.mrb[0].mxu0
      %v1106 = vadd.f32 %v918, %v1105
      %v1107 = vpop.f32.mrb[0].mxu0
      %1108 = vmatprep.mubr.bf16.mxu0 0
      %1109 = vmatmul.mubr.bf16.gmra.mrb[0].mxu0 %v969
      %v1110 = vpop.f32.mrb[0].mxu0
      %v1111 = vadd.f32 %v918, %v1110
      %v1112 = vpop.f32.mrb[0].mxu0
      %v1113 = vpop.f32.mrb[0].mxu0
      %v1114 = vadd.f32 %v918, %v1113
      %v1115 = vpop.f32.mrb[0].mxu0
      %1116 = vmatprep.mubr.bf16.mxu0 0
      %1117 = vmatmul.mubr.bf16.gmra.mrb[0].mxu0 %v972
      %v1118 = vpop.f32.mrb[0].mxu0
      %v1119 = vadd.f32 %v918, %v1118
      %v1120 = vpop.f32.mrb[0].mxu0
      %v1121 = vpop.f32.mrb[0].mxu0
      %v1122 = vadd.f32 %v918, %v1121
      %v1123 = vpop.f32.mrb[0].mxu0
      %1124 = vmatprep.mubr.bf16.mxu0 0
      %1125 = vmatmul.mubr.bf16.gmra.mrb[0].mxu0 %v975
      %v1126 = vpop.f32.mrb[0].mxu0
      %v1127 = vadd.f32 %v918, %v1126
      %v1128 = vpop.f32.mrb[0].mxu0
      %v1129 = vpop.f32.mrb[0].mxu0
      %v1130 = vadd.f32 %v918, %v1129
      %v1131 = vpop.f32.mrb[0].mxu0
      %1132 = vmatprep.mubr.bf16.mxu0 0
      %1133 = vmatmul.mubr.bf16.gmra.mrb[0].mxu0 %v978
      %v1134 = vpop.f32.mrb[0].mxu0
      %v1135 = vadd.f32 %v918, %v1134
      %v1136 = vpop.f32.mrb[0].mxu0
      %v1137 = vpop.f32.mrb[0].mxu0
      %v1138 = vadd.f32 %v918, %v1137
      %v1139 = vpop.f32.mrb[0].mxu0
      %1140 = vdwg.mxu0
      %vm1141 = vcmask 31744
      %1142 = vst.msk [vmem:[%s280] sm:$0xff] %vm1141, %v1015
      %1143 = vst.msk [vmem:[%s280 + $0x8] sm:$0xff] %vm1141, %v1018
      %1144 = vst.msk [vmem:[%s280 + $0x10] sm:$0xff] %vm1141, %v1023
      %1145 = vst.msk [vmem:[%s280 + $0x18] sm:$0xff] %vm1141, %v1026
      %1146 = vst.msk [vmem:[%s280 + $0x20] sm:$0xff] %vm1141, %v1031
      %1147 = vst.msk [vmem:[%s280 + $0x28] sm:$0xff] %vm1141, %v1034
      %1148 = vst.msk [vmem:[%s280 + $0x30] sm:$0xff] %vm1141, %v1039
      %1149 = vst.msk [vmem:[%s280 + $0x38] sm:$0xff] %vm1141, %v1042
      %1150 = vst.msk [vmem:[%s280 + $0x40] sm:$0xff] %vm1141, %v1047
      %1151 = vst.msk [vmem:[%s280 + $0x48] sm:$0xff] %vm1141, %v1050
      %1152 = vst.msk [vmem:[%s280 + $0x50] sm:$0xff] %vm1141, %v1055
      %1153 = vst.msk [vmem:[%s280 + $0x58] sm:$0xff] %vm1141, %v1058
      %1154 = vst.msk [vmem:[%s280 + $0x60] sm:$0xff] %vm1141, %v1063
      %1155 = vst.msk [vmem:[%s280 + $0x68] sm:$0xff] %vm1141, %v1066
      %1156 = vst.msk [vmem:[%s280 + $0x70] sm:$0xff] %vm1141, %v1071
      %1157 = vst.msk [vmem:[%s280 + $0x78] sm:$0xff] %vm1141, %v1074
      %1158 = vst.msk [vmem:[%s280 + $0x80] sm:$0xff] %vm1141, %v1079
      %1159 = vst.msk [vmem:[%s280 + $0x88] sm:$0xff] %vm1141, %v1082
      %1160 = vst.msk [vmem:[%s280 + $0x90] sm:$0xff] %vm1141, %v1087
      %1161 = vst.msk [vmem:[%s280 + $0x98] sm:$0xff] %vm1141, %v1090
      %1162 = vst.msk [vmem:[%s280 + $0xa0] sm:$0xff] %vm1141, %v1095
      %1163 = vst.msk [vmem:[%s280 + $0xa8] sm:$0xff] %vm1141, %v1098
      %1164 = vst.msk [vmem:[%s280 + $0xb0] sm:$0xff] %vm1141, %v1103
      %1165 = vst.msk [vmem:[%s280 + $0xb8] sm:$0xff] %vm1141, %v1106
      %1166 = vst.msk [vmem:[%s280 + $0xc0] sm:$0xff] %vm1141, %v1111
      %1167 = vst.msk [vmem:[%s280 + $0xc8] sm:$0xff] %vm1141, %v1114
      %1168 = vst.msk [vmem:[%s280 + $0xd0] sm:$0xff] %vm1141, %v1119
      %1169 = vst.msk [vmem:[%s280 + $0xd8] sm:$0xff] %vm1141, %v1122
      %1170 = vst.msk [vmem:[%s280 + $0xe0] sm:$0xff] %vm1141, %v1127
      %1171 = vst.msk [vmem:[%s280 + $0xe8] sm:$0xff] %vm1141, %v1130
      %1172 = vst.msk [vmem:[%s280 + $0xf0] sm:$0xff] %vm1141, %v1135
      %1173 = vst.msk [vmem:[%s280 + $0xf8] sm:$0xff] %vm1141, %v1138
      %s1174 = smul.u32 32, %s18
      %p1175 = scmp.lt.s32.totalorder %s1174, 127
      %s1176 = scalar_select %p1175, %s1174, 127
      %s1177 = smul.addr %s1176, 8
      %s1178 = scalar_lea.vmem %s7, %s1177
      // Predicated region
      $region49: #{tpu_custom_call.1} parent=47 // pred_check
        %p1179 = pneg %p188
      $region50: #{tpu_custom_call.1} parent=47 // pred_check_branch
        %1181 = sbr.rel (%p1179) target = $region52
      $region51: #{tpu_custom_call.1} parent=47 // pred_region
        %s1182 = smul.u32 32, %s18
      $region52: #{tpu_custom_call.1} parent=47 // pred_fallthru
        _
    $region48: #{tpu_custom_call.1} parent=5 // pred_fallthru
      _
    %p1183 = scmp.le.s32.totalorder 2, %s13
    // Predicated region
    $region53: #{tpu_custom_call.1} parent=5 // pred_check
      %p1184 = pneg %p1183
    $region54: #{tpu_custom_call.1} parent=5 // pred_check_branch
      %1186 = sbr.rel (%p1184) target = $region56
    $region55: #{tpu_custom_call.1} parent=5 // pred_region
      %s1187 = ssub.s32 %s13, 2
      // Predicated region
      $region57: #{tpu_custom_call.1} parent=55 // pred_check
        %p1188 = pneg %p194
      $region58: #{tpu_custom_call.1} parent=55 // pred_check_branch
        %1190 = sbr.rel (%p1188) target = $region60
      $region59: #{tpu_custom_call.1} parent=55 // pred_region
        %s1191 = smul.u32 32, %s19
        %p1192 = scmp.lt.s32.totalorder %s1191, 127
        %s1193 = scalar_select %p1192, %s1191, 127
        %s1194 = smul.addr %s1193, 8
        %s1195 = scalar_lea.vmem %s7, %s1194
      $region60: #{tpu_custom_call.1} parent=55 // pred_fallthru
        _
    $region56: #{tpu_custom_call.1} parent=5 // pred_fallthru
      _
  $region6: #{tpu_custom_call.1} parent=0 // loop_footer
    %s17 = sadd.s32 1, %s13
  $region7: #{tpu_custom_call.1} parent=0 // loop_footer_branch
    %12 = sbr.rel target = $region3
  $region8: #{tpu_custom_call.1} parent=0 // loop_exit
    _

</llo_original>
